<compile_context>
chip_gen: v7x
topology: tpu7x:2x2x1
jax: 0.10.0
libtpu: 0.0.40
codegen_flags: <defaults>
</compile_context>

<pallas_src>
import functools
import math

import jax
import jax.numpy as jnp
from jax import lax
from jax.experimental import pallas as pl
from jax.experimental.pallas import tpu as pltpu


LANES = 512            # lane-dense last dim (multiple of 128)
MAX_BLOCK_ROWS = 1024  # (1024, 512) f32 block = 2 MiB per input buffer
ROW_ALIGN = 16         # sublane alignment (covers f32 and 16-bit inputs)


def _cdiv(a, b):
    return -(-a // b)


def _masked_huber_kernel(p_ref, t_ref, msum_ref, lsum_ref, *,
                         delta, null_val, nan_null, rows, block_rows,
                         num_full_tiles, needs_tail_mask):
    i = pl.program_id(1)
    gt = pl.program_id(0) * pl.num_programs(1) + i   # logical global tile index

    @pl.when(i == 0)
    def _init():
        msum_ref[...] = jnp.zeros_like(msum_ref)
        lsum_ref[...] = jnp.zeros_like(lsum_ref)

    # Upcast on the loaded block: halves HBM bytes for 16-bit inputs vs wrapper astype.
    p = p_ref[...].astype(jnp.float32)
    t = t_ref[...].astype(jnp.float32)

    if nan_null:
        keep = ~jnp.isnan(t)
    else:
        keep = t != null_val
    mask = keep.astype(jnp.float32)

    diff = jnp.abs(p - t)
    huber = jnp.where(diff <= delta,
                      0.5 * diff * diff,
                      delta * (diff - 0.5 * delta))
    huber = jnp.where(jnp.isnan(huber), 0.0, huber)   # loss nan -> 0
    # Equivalent to (huber * {0,1}-mask) with nan->0, but nan/inf-safe and one op cheaper.
    kept = jnp.where(keep, huber, 0.0)

    sub = block_rows // 8

    def _accumulate(m, l):
        # vreg-aligned (8, LANES) partial sums; no per-tile cross-sublane reduce.
        msum_ref[...] += m.reshape(sub, 8, LANES).sum(axis=0)
        lsum_ref[...] += l.reshape(sub, 8, LANES).sum(axis=0)

    if not needs_tail_mask:
        _accumulate(mask, kept)
    else:
        @pl.when(gt < num_full_tiles)
        def _interior():
            _accumulate(mask, kept)

        @pl.when(gt >= num_full_tiles)
        def _boundary():
            row_ids = lax.broadcasted_iota(jnp.int32, (block_rows, LANES), 0)
            valid = (gt * block_rows + row_ids) < rows
            _accumulate(jnp.where(valid, mask, 0.0),
                        jnp.where(valid, kept, 0.0))


def masked_huber_loss(preds, target, *, delta=1.0, null_val=0.0):
    """Pallas TPU masked Huber loss; matches MaskedHuber(delta, null_val).forward."""
    assert preds.shape == target.shape
    n = int(preds.size)
    assert n > 0

    nan_null = isinstance(null_val, float) and math.isnan(null_val)

    # Stream native float dtypes; only promote non-float inputs.
    if not jnp.issubdtype(preds.dtype, jnp.floating):
        preds = preds.astype(jnp.float32)
    if not jnp.issubdtype(target.dtype, jnp.floating):
        target = target.astype(jnp.float32)

    p_flat = preds.reshape(-1)
    t_flat = target.reshape(-1)

    rows = _cdiv(n, LANES)
    rem = n % LANES
    if rem:
        # TODO(synk): ragged tail (numel % 512 != 0) falls back to one pad copy;
        # padding both operands with null_val contributes exactly 0 to every sum.
        pad = rows * LANES - n
        pad_val = float(null_val)
        p_flat = jnp.pad(p_flat, (0, pad), constant_values=pad_val)
        t_flat = jnp.pad(t_flat, (0, pad), constant_values=pad_val)
    p2d = p_flat.reshape(rows, LANES)   # zero-copy when rem == 0 (row-major bitcast)
    t2d = t_flat.reshape(rows, LANES)

    # Balanced tiling: pick tile count first, then tile height (<= MAX_BLOCK_ROWS).
    num_tiles = _cdiv(rows, MAX_BLOCK_ROWS)
    block_rows = _cdiv(_cdiv(rows, num_tiles), ROW_ALIGN) * ROW_ALIGN
    nblocks = _cdiv(rows, block_rows)

    num_splits = 2 if nblocks >= 2 else 1            # megacore split (v7x), neutral on 1-TC chips
    tiles_per_core = _cdiv(nblocks, num_splits)
    num_full_tiles = rows // block_rows
    needs_tail_mask = (num_splits * tiles_per_core * block_rows) > rows

    def in_index(c, i):
        # Clamp so fully-out-of-range tiles re-read the last valid block; their
        # contributions are zeroed in-kernel via the logical-row iota mask.
        return (jnp.minimum(c * tiles_per_core + i, nblocks - 1), 0)

    kernel = functools.partial(
        _masked_huber_kernel,
        delta=float(delta), null_val=float(null_val), nan_null=nan_null,
        rows=rows, block_rows=block_rows,
        num_full_tiles=num_full_tiles, needs_tail_mask=needs_tail_mask)

    out_shape = jax.ShapeDtypeStruct((num_splits, 8, LANES), jnp.float32)
    out_spec = pl.BlockSpec((None, 8, LANES), lambda c, i: (c, 0, 0))

    msum, lsum = pl.pallas_call(
        kernel,
        out_shape=(out_shape, out_shape),
        grid_spec=pltpu.PrefetchScalarGridSpec(
            num_scalar_prefetch=0,
            grid=(num_splits, tiles_per_core),
            in_specs=[
                pl.BlockSpec((block_rows, LANES), in_index),
                pl.BlockSpec((block_rows, LANES), in_index),
            ],
            out_specs=[out_spec, out_spec],
        ),
        compiler_params=pltpu.CompilerParams(
            dimension_semantics=("parallel", "arbitrary"),
        ),
    )(p2d, t2d)

    sum_mask = jnp.sum(msum)
    sum_kept = jnp.sum(lsum)

    def _masked_mean():
        # sum(huber*mask_norm)/n with mask_norm = mask/(mean(mask)+1e-10)
        return sum_kept / (sum_mask + jnp.float32(1e-10 * n))

    def _all_null_fallback():
        # mask all zeros -> mask := ones (reference prints a warning here).
        # TODO(synk): data-dependent host-side warning print has no Pallas equivalent.
        diff = jnp.abs(preds.astype(jnp.float32) - target.astype(jnp.float32))
        huber = jnp.where(diff <= delta, 0.5 * diff * diff,
                          delta * (diff - 0.5 * delta))
        huber = jnp.where(jnp.isnan(huber), 0.0, huber)
        return jnp.sum(huber) / jnp.float32(n)

    return lax.cond(sum_mask == 0.0, _all_null_fallback, _masked_mean)


def masked_huber_ref(preds, target, delta=1.0, null_val=0.0):
    """Pure-JAX reference with identical semantics (for correctness check)."""
    if isinstance(null_val, float) and math.isnan(null_val):
        mask = (~jnp.isnan(target)).astype(jnp.float32)
    else:
        mask = (target != null_val).astype(jnp.float32)
    all_zero = jnp.sum(mask) == 0
    norm = mask / (jnp.mean(mask) + 1e-10)
    norm = jnp.where(jnp.isnan(norm), 0.0, norm)
    mask_f = jnp.where(all_zero, jnp.ones_like(mask), norm)
    diff = jnp.abs(preds - target)
    huber = jnp.where(diff <= delta, 0.5 * jnp.square(diff),
                      delta * (diff - 0.5 * delta))
    loss = huber * mask_f
    loss = jnp.where(jnp.isnan(loss), 0.0, loss)
    return jnp.mean(loss)


if __name__ == "__main__":
    # Small shapes consistent with a spatio-temporal forecasting loss:
    # preds/target: (batch=2, channels=4, spatial=16, seq=16); delta=1.0, null_val=0.0.
    B, C, S, T = 2, 4, 16, 16
    key = jax.random.PRNGKey(0)
    k1, k2, k3 = jax.random.split(key, 3)
    preds = jax.random.normal(k1, (B, C, S, T), dtype=jnp.float32)
    vals = jax.random.normal(k2, (B, C, S, T), dtype=jnp.float32)
    # ~30% of targets are "null" (== 0.0) so the masking path is exercised.
    target = jnp.where(jax.random.uniform(k3, (B, C, S, T)) < 0.3, 0.0, vals)

    loss = masked_huber_loss(preds, target, delta=1.0, null_val=0.0)
    loss = jax.block_until_ready(loss)

    ref = masked_huber_ref(preds, target, delta=1.0, null_val=0.0)
    assert loss.shape == () and loss.dtype == jnp.float32
    assert jnp.allclose(loss, ref, rtol=1e-5, atol=1e-6), (float(loss), float(ref))

    print("KERNEL_OK")
</pallas_src>

<mosaic_0001>
module attributes {stable_mosaic.version = 11 : i64} {
  func.func @_masked_huber_kernel(%arg0: i32, %arg1: i32, %arg2: memref<16x512xf32, #tpu.memory_space<vmem>>, %arg3: memref<16x512xf32, #tpu.memory_space<vmem>>, %arg4: memref<1x8x512xf32, #tpu.memory_space<vmem>>, %arg5: memref<1x8x512xf32, #tpu.memory_space<vmem>>) attributes {dimension_semantics = [#tpu.dimension_semantics<parallel>, #tpu.dimension_semantics<arbitrary>], iteration_bounds = array<i64: 1, 1>, scalar_prefetch = 0 : i64, scratch_operands = 0 : i64, tpu.core_type = #tpu.core_type<tc>, window_params = [{transform_indices = @transform_0, window_bounds = array<i64: 16, 512>}, {transform_indices = @transform_1, window_bounds = array<i64: 16, 512>}, {transform_indices = @transform_2, window_bounds = array<i64: 1, 8, 512>}, {transform_indices = @transform_3, window_bounds = array<i64: 1, 8, 512>}]} {
    %c1_i32 = arith.constant 1 : i32
    %0 = arith.muli %arg0, %c1_i32 : i32
    %1 = arith.addi %0, %arg1 : i32
    %c0_i32 = arith.constant 0 : i32
    %2 = arith.cmpi eq, %arg1, %c0_i32 : i32
    %3 = arith.extui %2 : i1 to i32
    %c0_i32_0 = arith.constant 0 : i32
    %4 = arith.cmpi ne, %3, %c0_i32_0 : i32
    scf.if %4 {
      %cst_14 = arith.constant 0.000000e+00 : f32
      %34 = vector.broadcast %cst_14 : f32 to vector<8x512xf32>
      %c0_15 = arith.constant 0 : index
      %c0_16 = arith.constant 0 : index
      %c0_17 = arith.constant 0 : index
      %35 = vector.load %arg4[%c0_15, %c0_16, %c0_17] : memref<1x8x512xf32, #tpu.memory_space<vmem>>, vector<1x8x512xf32>
      %36 = vector.shape_cast %35 : vector<1x8x512xf32> to vector<8x512xf32>
      %37 = vector.shape_cast %34 : vector<8x512xf32> to vector<1x8x512xf32>
      tpu.vector_store %arg4[%c0_15, %c0_16, %c0_17], %37 {strides = array<i32>} : memref<1x8x512xf32, #tpu.memory_space<vmem>>, vector<1x8x512xf32>,
      %cst_18 = arith.constant 0.000000e+00 : f32
      %38 = vector.broadcast %cst_18 : f32 to vector<8x512xf32>
      %c0_19 = arith.constant 0 : index
      %c0_20 = arith.constant 0 : index
      %c0_21 = arith.constant 0 : index
      %39 = vector.load %arg5[%c0_19, %c0_20, %c0_21] : memref<1x8x512xf32, #tpu.memory_space<vmem>>, vector<1x8x512xf32>
      %40 = vector.shape_cast %39 : vector<1x8x512xf32> to vector<8x512xf32>
      %41 = vector.shape_cast %38 : vector<8x512xf32> to vector<1x8x512xf32>
      tpu.vector_store %arg5[%c0_19, %c0_20, %c0_21], %41 {strides = array<i32>} : memref<1x8x512xf32, #tpu.memory_space<vmem>>, vector<1x8x512xf32>,
    } else {
    }
    %c0 = arith.constant 0 : index
    %c0_1 = arith.constant 0 : index
    %5 = vector.load %arg2[%c0, %c0_1] : memref<16x512xf32, #tpu.memory_space<vmem>>, vector<16x512xf32>
    %c0_2 = arith.constant 0 : index
    %c0_3 = arith.constant 0 : index
    %6 = vector.load %arg3[%c0_2, %c0_3] : memref<16x512xf32, #tpu.memory_space<vmem>>, vector<16x512xf32>
    %cst = arith.constant 0.000000e+00 : f32
    %7 = vector.broadcast %cst : f32 to vector<16x512xf32>
    %8 = arith.cmpf one, %6, %7 : vector<16x512xf32>
    %9 = arith.extui %8 : vector<16x512xi1> to vector<16x512xi32>
    %10 = arith.sitofp %9 : vector<16x512xi32> to vector<16x512xf32>
    %11 = arith.subf %5, %6 : vector<16x512xf32>
    %12 = math.absf %11 : vector<16x512xf32>
    %cst_4 = arith.constant 1.000000e+00 : f32
    %13 = vector.broadcast %cst_4 : f32 to vector<16x512xf32>
    %14 = arith.cmpf ole, %12, %13 : vector<16x512xf32>
    %cst_5 = arith.constant 5.000000e-01 : f32
    %15 = vector.broadcast %cst_5 : f32 to vector<16x512xf32>
    %16 = arith.mulf %15, %12 : vector<16x512xf32>
    %17 = arith.mulf %16, %12 : vector<16x512xf32>
    %cst_6 = arith.constant 5.000000e-01 : f32
    %18 = vector.broadcast %cst_6 : f32 to vector<16x512xf32>
    %19 = arith.subf %12, %18 : vector<16x512xf32>
    %cst_7 = arith.constant 1.000000e+00 : f32
    %20 = vector.broadcast %cst_7 : f32 to vector<16x512xf32>
    %21 = arith.mulf %20, %19 : vector<16x512xf32>
    %22 = arith.select %14, %17, %21 : vector<16x512xi1>, vector<16x512xf32>
    %23 = arith.cmpf one, %22, %22 : vector<16x512xf32>
    %cst_8 = arith.constant 0.000000e+00 : f32
    %24 = vector.broadcast %cst_8 : f32 to vector<16x512xf32>
    %25 = arith.select %23, %24, %22 : vector<16x512xi1>, vector<16x512xf32>
    %cst_9 = arith.constant 0.000000e+00 : f32
    %26 = vector.broadcast %cst_9 : f32 to vector<16x512xf32>
    %27 = arith.select %8, %25, %26 : vector<16x512xi1>, vector<16x512xf32>
    %c0_i32_10 = arith.constant 0 : i32
    %28 = arith.cmpi slt, %1, %c0_i32_10 : i32
    %29 = arith.extui %28 : i1 to i32
    %c0_i32_11 = arith.constant 0 : i32
    %30 = arith.cmpi ne, %29, %c0_i32_11 : i32
    scf.if %30 {
      %c0_14 = arith.constant 0 : index
      %c0_15 = arith.constant 0 : index
      %c0_16 = arith.constant 0 : index
      %34 = vector.load %arg4[%c0_14, %c0_15, %c0_16] : memref<1x8x512xf32, #tpu.memory_space<vmem>>, vector<1x8x512xf32>
      %35 = vector.shape_cast %34 : vector<1x8x512xf32> to vector<8x512xf32>
      %36 = vector.shape_cast %10 : vector<16x512xf32> to vector<2x8x512xf32>
      %cst_17 = arith.constant dense<0.000000e+00> : vector<8x512xf32>
      %37 = vector.multi_reduction <add>, %36, %cst_17 [0] : vector<2x8x512xf32> to vector<8x512xf32>
      %38 = arith.addf %35, %37 : vector<8x512xf32>
      %c0_18 = arith.constant 0 : index
      %c0_19 = arith.constant 0 : index
      %c0_20 = arith.constant 0 : index
      %39 = vector.load %arg4[%c0_18, %c0_19, %c0_20] : memref<1x8x512xf32, #tpu.memory_space<vmem>>, vector<1x8x512xf32>
      %40 = vector.shape_cast %39 : vector<1x8x512xf32> to vector<8x512xf32>
      %41 = vector.shape_cast %38 : vector<8x512xf32> to vector<1x8x512xf32>
      tpu.vector_store %arg4[%c0_18, %c0_19, %c0_20], %41 {strides = array<i32>} : memref<1x8x512xf32, #tpu.memory_space<vmem>>, vector<1x8x512xf32>,
      %c0_21 = arith.constant 0 : index
      %c0_22 = arith.constant 0 : index
      %c0_23 = arith.constant 0 : index
      %42 = vector.load %arg5[%c0_21, %c0_22, %c0_23] : memref<1x8x512xf32, #tpu.memory_space<vmem>>, vector<1x8x512xf32>
      %43 = vector.shape_cast %42 : vector<1x8x512xf32> to vector<8x512xf32>
      %44 = vector.shape_cast %27 : vector<16x512xf32> to vector<2x8x512xf32>
      %cst_24 = arith.constant dense<0.000000e+00> : vector<8x512xf32>
      %45 = vector.multi_reduction <add>, %44, %cst_24 [0] : vector<2x8x512xf32> to vector<8x512xf32>
      %46 = arith.addf %43, %45 : vector<8x512xf32>
      %c0_25 = arith.constant 0 : index
      %c0_26 = arith.constant 0 : index
      %c0_27 = arith.constant 0 : index
      %47 = vector.load %arg5[%c0_25, %c0_26, %c0_27] : memref<1x8x512xf32, #tpu.memory_space<vmem>>, vector<1x8x512xf32>
      %48 = vector.shape_cast %47 : vector<1x8x512xf32> to vector<8x512xf32>
      %49 = vector.shape_cast %46 : vector<8x512xf32> to vector<1x8x512xf32>
      tpu.vector_store %arg5[%c0_25, %c0_26, %c0_27], %49 {strides = array<i32>} : memref<1x8x512xf32, #tpu.memory_space<vmem>>, vector<1x8x512xf32>,
    } else {
    }
    %c0_i32_12 = arith.constant 0 : i32
    %31 = arith.cmpi sge, %1, %c0_i32_12 : i32
    %32 = arith.extui %31 : i1 to i32
    %c0_i32_13 = arith.constant 0 : i32
    %33 = arith.cmpi ne, %32, %c0_i32_13 : i32
    scf.if %33 {
      %34 = tpu.iota {dimensions = array<i32: 0>} : vector<16x512xi32>
      %c16_i32 = arith.constant 16 : i32
      %35 = arith.muli %1, %c16_i32 : i32
      %36 = vector.broadcast %35 : i32 to vector<16x512xi32>
      %37 = arith.addi %36, %34 : vector<16x512xi32>
      %c4_i32 = arith.constant 4 : i32
      %38 = vector.broadcast %c4_i32 : i32 to vector<16x512xi32>
      %39 = arith.cmpi slt, %37, %38 : vector<16x512xi32>
      %cst_14 = arith.constant 0.000000e+00 : f32
      %40 = vector.broadcast %cst_14 : f32 to vector<16x512xf32>
      %41 = arith.select %39, %10, %40 : vector<16x512xi1>, vector<16x512xf32>
      %cst_15 = arith.constant 0.000000e+00 : f32
      %42 = vector.broadcast %cst_15 : f32 to vector<16x512xf32>
      %43 = arith.select %39, %27, %42 : vector<16x512xi1>, vector<16x512xf32>
      %c0_16 = arith.constant 0 : index
      %c0_17 = arith.constant 0 : index
      %c0_18 = arith.constant 0 : index
      %44 = vector.load %arg4[%c0_16, %c0_17, %c0_18] : memref<1x8x512xf32, #tpu.memory_space<vmem>>, vector<1x8x512xf32>
      %45 = vector.shape_cast %44 : vector<1x8x512xf32> to vector<8x512xf32>
      %46 = vector.shape_cast %41 : vector<16x512xf32> to vector<2x8x512xf32>
      %cst_19 = arith.constant dense<0.000000e+00> : vector<8x512xf32>
      %47 = vector.multi_reduction <add>, %46, %cst_19 [0] : vector<2x8x512xf32> to vector<8x512xf32>
      %48 = arith.addf %45, %47 : vector<8x512xf32>
      %c0_20 = arith.constant 0 : index
      %c0_21 = arith.constant 0 : index
      %c0_22 = arith.constant 0 : index
      %49 = vector.load %arg4[%c0_20, %c0_21, %c0_22] : memref<1x8x512xf32, #tpu.memory_space<vmem>>, vector<1x8x512xf32>
      %50 = vector.shape_cast %49 : vector<1x8x512xf32> to vector<8x512xf32>
      %51 = vector.shape_cast %48 : vector<8x512xf32> to vector<1x8x512xf32>
      tpu.vector_store %arg4[%c0_20, %c0_21, %c0_22], %51 {strides = array<i32>} : memref<1x8x512xf32, #tpu.memory_space<vmem>>, vector<1x8x512xf32>,
      %c0_23 = arith.constant 0 : index
      %c0_24 = arith.constant 0 : index
      %c0_25 = arith.constant 0 : index
      %52 = vector.load %arg5[%c0_23, %c0_24, %c0_25] : memref<1x8x512xf32, #tpu.memory_space<vmem>>, vector<1x8x512xf32>
      %53 = vector.shape_cast %52 : vector<1x8x512xf32> to vector<8x512xf32>
      %54 = vector.shape_cast %43 : vector<16x512xf32> to vector<2x8x512xf32>
      %cst_26 = arith.constant dense<0.000000e+00> : vector<8x512xf32>
      %55 = vector.multi_reduction <add>, %54, %cst_26 [0] : vector<2x8x512xf32> to vector<8x512xf32>
      %56 = arith.addf %53, %55 : vector<8x512xf32>
      %c0_27 = arith.constant 0 : index
      %c0_28 = arith.constant 0 : index
      %c0_29 = arith.constant 0 : index
      %57 = vector.load %arg5[%c0_27, %c0_28, %c0_29] : memref<1x8x512xf32, #tpu.memory_space<vmem>>, vector<1x8x512xf32>
      %58 = vector.shape_cast %57 : vector<1x8x512xf32> to vector<8x512xf32>
      %59 = vector.shape_cast %56 : vector<8x512xf32> to vector<1x8x512xf32>
      tpu.vector_store %arg5[%c0_27, %c0_28, %c0_29], %59 {strides = array<i32>} : memref<1x8x512xf32, #tpu.memory_space<vmem>>, vector<1x8x512xf32>,
    } else {
    }
    return
  }
  func.func @transform_0(%arg0: i32, %arg1: i32) -> (i32, i32) {
    %c1_i32 = arith.constant 1 : i32
    %0 = arith.muli %arg0, %c1_i32 : i32
    %1 = arith.addi %0, %arg1 : i32
    %c0_i32 = arith.constant 0 : i32
    %2 = arith.minsi %1, %c0_i32 : i32
    %c0_i32_0 = arith.constant 0 : i32
    %c0_i32_1 = arith.constant 0 : i32
    return %2, %c0_i32_0 : i32, i32
  }
  func.func @transform_1(%arg0: i32, %arg1: i32) -> (i32, i32) {
    %c1_i32 = arith.constant 1 : i32
    %0 = arith.muli %arg0, %c1_i32 : i32
    %1 = arith.addi %0, %arg1 : i32
    %c0_i32 = arith.constant 0 : i32
    %2 = arith.minsi %1, %c0_i32 : i32
    %c0_i32_0 = arith.constant 0 : i32
    %c0_i32_1 = arith.constant 0 : i32
    return %2, %c0_i32_0 : i32, i32
  }
  func.func @transform_2(%arg0: i32, %arg1: i32) -> (i32, i32, i32) {
    %c0_i32 = arith.constant 0 : i32
    %c0_i32_0 = arith.constant 0 : i32
    %c0_i32_1 = arith.constant 0 : i32
    return %arg0, %c0_i32, %c0_i32_0 : i32, i32, i32
  }
  func.func @transform_3(%arg0: i32, %arg1: i32) -> (i32, i32, i32) {
    %c0_i32 = arith.constant 0 : i32
    %c0_i32_0 = arith.constant 0 : i32
    %c0_i32_1 = arith.constant 0 : i32
    return %arg0, %c0_i32, %c0_i32_0 : i32, i32, i32
  }
}

</mosaic_0001>

<llo_original>
// kernel: tpu_custom_call.1
$region0: #{tpu_custom_call.1}
  #allocation0 [shape = 'u32[]', space=smem, size = 0x4, offset = 0x4, fixed_abs, tag = 'smem constant byte address 0x4 - core index']
  #allocation1 [shape = 'u32[144,128]{1,0:T(1,128)}', space=vmem, size = 0x12000, scoped, tag = 'internal scratch']
  %s0 = inlined_call_operand.hbm [shape: f32[4,512], index: 0, kind: input, shape index: {}]
  %s1 = inlined_call_operand.hbm [shape: f32[4,512], index: 1, kind: input, shape index: {}]
  %s2 = inlined_call_operand.hbm [shape: f32[1,8,512], index: 2, kind: output, shape index: {0}]
  %s3 = inlined_call_operand.hbm [shape: f32[1,8,512], index: 3, kind: output, shape index: {1}]
  %4 = xla_tuple %s2, %s3
  %s5 = sld [smem:[#allocation0]]
  $region46: #{tpu_custom_call.1} parent=0
    _
  %s7 = ssub.s32 1, %s5
  %s8 = scalar_select 0, %s7, %s5
  $region1: #{tpu_custom_call.1} parent=0
    #allocation2 [shape = 'u8[32768]{0}', space=vmem, size = 0x8000, scoped, tag = 'input window, operand 0, single buffered']
    #allocation3 [shape = 's32[1]{0}', space=sflag, size = 0x4, scoped, tag = 'scoped memory for tpu_custom_call.1']
    #allocation4 [shape = 's32[1]{0}', space=sflag, size = 0x4, scoped, tag = 'scoped memory for tpu_custom_call.1']
    #allocation5 [shape = 'u8[32768]{0}', space=vmem, size = 0x8000, scoped, tag = 'input window, operand 1, single buffered']
    #allocation6 [shape = 's32[1]{0}', space=sflag, size = 0x4, scoped, tag = 'scoped memory for tpu_custom_call.1']
    #allocation7 [shape = 'u8[16384]{0}', space=vmem, size = 0x4000, scoped, tag = 'output window, operand 0, single buffered']
    #allocation8 [shape = 'u8[16384]{0}', space=vmem, size = 0x4000, scoped, tag = 'output window, operand 1, single buffered']
    #allocation9 [shape = 's32[1]{0}', space=sflag, size = 0x4, scoped, tag = 'scoped memory for tpu_custom_call.1']
    %9 = vsyncpa [#allocation3], 0
    %10 = vsyncpa [#allocation6], 0
    %11 = vsyncpa [#allocation4], 0
    %12 = vsyncpa [#allocation9], 0
    // Predicated region
    $region2: #{tpu_custom_call.1} parent=1 // pred_check
      _
    $region3: #{tpu_custom_call.1} parent=1 // pred_check_branch
      %14 = sbr.rel (0) target = $region5
    $region4: #{tpu_custom_call.1} parent=1 // pred_region
      %s15 = sadd.s32 0, 0
      %p16 = scmp.lt.s32.totalorder %s15, 0
      %s17 = scalar_select %p16, %s15, 0
      %s18 = smul.u32 4, %s17
      %s19 = ssub.s32 1, %s18
      %s20 = smul.u32 64, %s19
      %s21 = smul.u32 %s20, 4
      %s23 = ssub.s32 1024, %s21
      %24 = vsyncadd [#allocation3], %s23
      %p25 = scmp.ne.s32.totalorder 0, %s21
      %s26 = smul.addr %s18, 4
      %s27 = smul.addr %s26, 64
      %s28 = scalar_lea.hbm %s0, %s27
      %s29 = smul.u32 16, %s19
      %s30 = sshll.u32 [#allocation2], 4
      %s31 = int_to_ptr.vmem [resolvable:$true] %s30
      %s32 = sshll.u32 %s29, 4
      %36 = dma.hbm_to_vmem [thread:$0]  (%p25), %s28, %s32, %s31, [#allocation3], 256, 256, 16
    $region5: #{tpu_custom_call.1} parent=1 // pred_fallthru
      _
    // Predicated region
    $region6: #{tpu_custom_call.1} parent=1 // pred_check
      _
    $region7: #{tpu_custom_call.1} parent=1 // pred_check_branch
      %38 = sbr.rel (0) target = $region9
    $region8: #{tpu_custom_call.1} parent=1 // pred_region
      %s39 = sadd.s32 0, 0
      %p40 = scmp.lt.s32.totalorder %s39, 0
      %s41 = scalar_select %p40, %s39, 0
      %s42 = smul.u32 4, %s41
      %s43 = ssub.s32 1, %s42
      %s44 = smul.u32 64, %s43
      %s45 = smul.u32 %s44, 4
      %s47 = ssub.s32 1024, %s45
      %48 = vsyncadd [#allocation6], %s47
      %p49 = scmp.ne.s32.totalorder 0, %s45
      %s50 = smul.addr %s42, 4
      %s51 = smul.addr %s50, 64
      %s52 = scalar_lea.hbm %s1, %s51
      %s53 = smul.u32 16, %s43
      %s54 = sshll.u32 [#allocation5], 4
      %s55 = int_to_ptr.vmem [resolvable:$true] %s54
      %s56 = sshll.u32 %s53, 4
      %60 = dma.hbm_to_vmem [thread:$0]  (%p49), %s52, %s56, %s55, [#allocation6], 256, 256, 16
    $region9: #{tpu_custom_call.1} parent=1 // pred_fallthru
      _
    // Predicated region
    $region10: #{tpu_custom_call.1} parent=1 // pred_check
      _
    $region11: #{tpu_custom_call.1} parent=1 // pred_check_branch
      %62 = sbr.rel (0) target = $region13
    $region12: #{tpu_custom_call.1} parent=1 // pred_region
      %63 = dma.done [#allocation3], 1024
    $region13: #{tpu_custom_call.1} parent=1 // pred_fallthru
      _
    // Predicated region
    $region14: #{tpu_custom_call.1} parent=1 // pred_check
      _
    $region15: #{tpu_custom_call.1} parent=1 // pred_check_branch
      %65 = sbr.rel (0) target = $region17
    $region16: #{tpu_custom_call.1} parent=1 // pred_region
      %66 = dma.done [#allocation6], 1024
    $region17: #{tpu_custom_call.1} parent=1 // pred_fallthru
      _
    %s67 = sadd.s32 0, 0
    %p68 = scmp.lt.s32.totalorder %s67, 0
    %s69 = scalar_select %p68, %s67, 0
    %s70 = smul.u32 4, %s69
    %s71 = ssub.s32 1, %s70
    %s72 = smul.u32 64, %s71
    %s73 = smul.u32 %s72, 4
    %s74 = sadd.s32 0, 0
    %p75 = scmp.lt.s32.totalorder %s74, 0
    %s76 = scalar_select %p75, %s74, 0
    %s77 = smul.u32 4, %s76
    %s78 = ssub.s32 1, %s77
    %s79 = smul.u32 64, %s78
    %s80 = smul.u32 %s79, 4
    %s81 = sadd.s32 0, 0
    %p82 = scmp.eq.s32.totalorder 0, 0
    // Predicated region
    $region18: #{tpu_custom_call.1} parent=1 // pred_check
      %p83 = pneg %p82
    $region19: #{tpu_custom_call.1} parent=1 // pred_check_branch
      %85 = sbr.rel (%p83) target = $region21
    $region20: #{tpu_custom_call.1} parent=1 // pred_region
      %86 = vst [vmem:[#allocation7] sm:$0xff] 0.0
      %87 = vst [vmem:[#allocation7 + $0x8] sm:$0xff] 0.0
      %88 = vst [vmem:[#allocation7 + $0x10] sm:$0xff] 0.0
      %89 = vst [vmem:[#allocation7 + $0x18] sm:$0xff] 0.0
      %90 = vst [vmem:[#allocation8] sm:$0xff] 0.0
      %91 = vst [vmem:[#allocation8 + $0x8] sm:$0xff] 0.0
      %92 = vst [vmem:[#allocation8 + $0x10] sm:$0xff] 0.0
      %93 = vst [vmem:[#allocation8 + $0x18] sm:$0xff] 0.0
    $region21: #{tpu_custom_call.1} parent=1 // pred_fallthru
      _
    %v94 = vld [vmem:[#allocation2] sm:$0xff]
    %v95 = vld [vmem:[#allocation2 + $0x8] sm:$0xff]
    %v96 = vld [vmem:[#allocation2 + $0x10] sm:$0xff]
    %v97 = vld [vmem:[#allocation2 + $0x18] sm:$0xff]
    %v98 = vld [vmem:[#allocation2 + $0x20] sm:$0xff]
    %v99 = vld [vmem:[#allocation2 + $0x28] sm:$0xff]
    %v100 = vld [vmem:[#allocation2 + $0x30] sm:$0xff]
    %v101 = vld [vmem:[#allocation2 + $0x38] sm:$0xff]
    %v102 = vld [vmem:[#allocation5] sm:$0xff]
    %v103 = vld [vmem:[#allocation5 + $0x8] sm:$0xff]
    %v104 = vld [vmem:[#allocation5 + $0x10] sm:$0xff]
    %v105 = vld [vmem:[#allocation5 + $0x18] sm:$0xff]
    %v106 = vld [vmem:[#allocation5 + $0x20] sm:$0xff]
    %v107 = vld [vmem:[#allocation5 + $0x28] sm:$0xff]
    %v108 = vld [vmem:[#allocation5 + $0x30] sm:$0xff]
    %v109 = vld [vmem:[#allocation5 + $0x38] sm:$0xff]
    %vm110 = vcmp.ne.f32.partialorder %v102, 0.0
    %vm111 = vcmp.ne.f32.partialorder %v103, 0.0
    %vm112 = vcmp.ne.f32.partialorder %v104, 0.0
    %vm113 = vcmp.ne.f32.partialorder %v105, 0.0
    %vm114 = vcmp.ne.f32.partialorder %v106, 0.0
    %vm115 = vcmp.ne.f32.partialorder %v107, 0.0
    %vm116 = vcmp.ne.f32.partialorder %v108, 0.0
    %vm117 = vcmp.ne.f32.partialorder %v109, 0.0
    %v118 = vsel %vm110, 1, 0
    %v119 = vsel %vm111, 1, 0
    %v120 = vsel %vm112, 1, 0
    %v121 = vsel %vm113, 1, 0
    %v122 = vsel %vm114, 1, 0
    %v123 = vsel %vm115, 1, 0
    %v124 = vsel %vm116, 1, 0
    %v125 = vsel %vm117, 1, 0
    %v126 = vcvt.s32.f32 %v118
    %v127 = vcvt.s32.f32 %v119
    %v128 = vcvt.s32.f32 %v120
    %v129 = vcvt.s32.f32 %v121
    %v130 = vcvt.s32.f32 %v122
    %v131 = vcvt.s32.f32 %v123
    %v132 = vcvt.s32.f32 %v124
    %v133 = vcvt.s32.f32 %v125
    %v134 = vsub.f32 %v94, %v102
    %v135 = vsub.f32 %v95, %v103
    %v136 = vsub.f32 %v96, %v104
    %v137 = vsub.f32 %v97, %v105
    %v138 = vsub.f32 %v98, %v106
    %v139 = vsub.f32 %v99, %v107
    %v140 = vsub.f32 %v100, %v108
    %v141 = vsub.f32 %v101, %v109
    %v142 = vand.u32 2147483647, %v134
    %v143 = vand.u32 2147483647, %v135
    %v144 = vand.u32 2147483647, %v136
    %v145 = vand.u32 2147483647, %v137
    %v146 = vand.u32 2147483647, %v138
    %v147 = vand.u32 2147483647, %v139
    %v148 = vand.u32 2147483647, %v140
    %v149 = vand.u32 2147483647, %v141
    %vm150 = vcmp.le.f32.partialorder %v142, 1.0
    %vm151 = vcmp.le.f32.partialorder %v143, 1.0
    %vm152 = vcmp.le.f32.partialorder %v144, 1.0
    %vm153 = vcmp.le.f32.partialorder %v145, 1.0
    %vm154 = vcmp.le.f32.partialorder %v146, 1.0
    %vm155 = vcmp.le.f32.partialorder %v147, 1.0
    %vm156 = vcmp.le.f32.partialorder %v148, 1.0
    %vm157 = vcmp.le.f32.partialorder %v149, 1.0
    %v158 = vmul.f32 %v142, 0.5
    %v159 = vmul.f32 %v143, 0.5
    %v160 = vmul.f32 %v144, 0.5
    %v161 = vmul.f32 %v145, 0.5
    %v162 = vmul.f32 %v146, 0.5
    %v163 = vmul.f32 %v147, 0.5
    %v164 = vmul.f32 %v148, 0.5
    %v165 = vmul.f32 %v149, 0.5
    %v166 = vmul.f32 %v158, %v142
    %v167 = vmul.f32 %v159, %v143
    %v168 = vmul.f32 %v160, %v144
    %v169 = vmul.f32 %v161, %v145
    %v170 = vmul.f32 %v162, %v146
    %v171 = vmul.f32 %v163, %v147
    %v172 = vmul.f32 %v164, %v148
    %v173 = vmul.f32 %v165, %v149
    %v174 = vsub.f32 %v142, 0.5
    %v175 = vsub.f32 %v143, 0.5
    %v176 = vsub.f32 %v144, 0.5
    %v177 = vsub.f32 %v145, 0.5
    %v178 = vsub.f32 %v146, 0.5
    %v179 = vsub.f32 %v147, 0.5
    %v180 = vsub.f32 %v148, 0.5
    %v181 = vsub.f32 %v149, 0.5
    %v182 = vsel %vm150, %v166, %v174
    %v183 = vsel %vm151, %v167, %v175
    %v184 = vsel %vm152, %v168, %v176
    %v185 = vsel %vm153, %v169, %v177
    %v186 = vsel %vm154, %v170, %v178
    %v187 = vsel %vm155, %v171, %v179
    %v188 = vsel %vm156, %v172, %v180
    %v189 = vsel %vm157, %v173, %v181
    %vm190 = vcmp.ne.f32.partialorder %v182, %v182
    %vm191 = vcmp.ne.f32.partialorder %v183, %v183
    %vm192 = vcmp.ne.f32.partialorder %v184, %v184
    %vm193 = vcmp.ne.f32.partialorder %v185, %v185
    %vm194 = vcmp.ne.f32.partialorder %v186, %v186
    %vm195 = vcmp.ne.f32.partialorder %v187, %v187
    %vm196 = vcmp.ne.f32.partialorder %v188, %v188
    %vm197 = vcmp.ne.f32.partialorder %v189, %v189
    %v198 = vsel %vm190, 0.0, %v182
    %v199 = vsel %vm191, 0.0, %v183
    %v200 = vsel %vm192, 0.0, %v184
    %v201 = vsel %vm193, 0.0, %v185
    %v202 = vsel %vm194, 0.0, %v186
    %v203 = vsel %vm195, 0.0, %v187
    %v204 = vsel %vm196, 0.0, %v188
    %v205 = vsel %vm197, 0.0, %v189
    %v206 = vsel %vm110, %v198, 0.0
    %v207 = vsel %vm111, %v199, 0.0
    %v208 = vsel %vm112, %v200, 0.0
    %v209 = vsel %vm113, %v201, 0.0
    %v210 = vsel %vm114, %v202, 0.0
    %v211 = vsel %vm115, %v203, 0.0
    %v212 = vsel %vm116, %v204, 0.0
    %v213 = vsel %vm117, %v205, 0.0
    %p214 = scmp.lt.s32.totalorder %s81, 0
    // Predicated region
    $region22: #{tpu_custom_call.1} parent=1 // pred_check
      %p215 = pneg %p214
    $region23: #{tpu_custom_call.1} parent=1 // pred_check_branch
      %217 = sbr.rel (%p215) target = $region25
    $region24: #{tpu_custom_call.1} parent=1 // pred_region
      %v218 = vld [vmem:[#allocation7] sm:$0xff]
      %v219 = vld [vmem:[#allocation7 + $0x8] sm:$0xff]
      %v220 = vld [vmem:[#allocation7 + $0x10] sm:$0xff]
      %v221 = vld [vmem:[#allocation7 + $0x18] sm:$0xff]
      %v230 = vcombine.low %v126, %v128
      %v231 = vcombine.high %v126, %v128
      %v232 = vcombine.low %v127, %v129
      %v233 = vcombine.high %v127, %v129
      %v234 = vcombine.low %v130, %v132
      %v235 = vcombine.high %v130, %v132
      %v236 = vcombine.low %v131, %v133
      %v237 = vcombine.high %v131, %v133
      %v246 = vadd.f32 %v230, %v234
      %v247 = vadd.f32 %v231, %v235
      %v248 = vadd.f32 %v232, %v236
      %v249 = vadd.f32 %v233, %v237
      %v250 = vadd.f32 %v218, %v246
      %v251 = vadd.f32 %v219, %v247
      %v252 = vadd.f32 %v220, %v248
      %v253 = vadd.f32 %v221, %v249
      %254 = vst [vmem:[#allocation7] sm:$0xff] %v250
      %255 = vst [vmem:[#allocation7 + $0x8] sm:$0xff] %v251
      %256 = vst [vmem:[#allocation7 + $0x10] sm:$0xff] %v252
      %257 = vst [vmem:[#allocation7 + $0x18] sm:$0xff] %v253
      %v258 = vld [vmem:[#allocation8] sm:$0xff]
      %v259 = vld [vmem:[#allocation8 + $0x8] sm:$0xff]
      %v260 = vld [vmem:[#allocation8 + $0x10] sm:$0xff]
      %v261 = vld [vmem:[#allocation8 + $0x18] sm:$0xff]
      %v270 = vcombine.low %v206, %v208
      %v271 = vcombine.high %v206, %v208
      %v272 = vcombine.low %v207, %v209
      %v273 = vcombine.high %v207, %v209
      %v274 = vcombine.low %v210, %v212
      %v275 = vcombine.high %v210, %v212
      %v276 = vcombine.low %v211, %v213
      %v277 = vcombine.high %v211, %v213
      %v286 = vadd.f32 %v270, %v274
      %v287 = vadd.f32 %v271, %v275
      %v288 = vadd.f32 %v272, %v276
      %v289 = vadd.f32 %v273, %v277
      %v290 = vadd.f32 %v258, %v286
      %v291 = vadd.f32 %v259, %v287
      %v292 = vadd.f32 %v260, %v288
      %v293 = vadd.f32 %v261, %v289
      %294 = vst [vmem:[#allocation8] sm:$0xff] %v290
      %295 = vst [vmem:[#allocation8 + $0x8] sm:$0xff] %v291
      %296 = vst [vmem:[#allocation8 + $0x10] sm:$0xff] %v292
      %297 = vst [vmem:[#allocation8 + $0x18] sm:$0xff] %v293
    $region25: #{tpu_custom_call.1} parent=1 // pred_fallthru
      _
    %p298 = scmp.ge.s32.totalorder %s81, 0
    // Predicated region
    $region26: #{tpu_custom_call.1} parent=1 // pred_check
      %p299 = pneg %p298
    $region27: #{tpu_custom_call.1} parent=1 // pred_check_branch
      %301 = sbr.rel (%p299) target = $region29
    $region28: #{tpu_custom_call.1} parent=1 // pred_region
      %v302 = vlaneseq
      %v303 = vshrl.u32 %v302, 7
      %v304 = vadd.s32 %v303, 8
      %s305 = smul.u32 %s81, 16
      %v306 = vstv %s305
      %v307 = vadd.s32 %v306, %v303
      %v308 = vadd.s32 %v306, %v304
      %vm309 = vcmp.lt.s32.totalorder %v307, 4
      %vm310 = vcmp.lt.s32.totalorder %v308, 4
      %v319 = vcombine.low %v126, %v128
      %v320 = vcombine.high %v126, %v128
      %v321 = vcombine.low %v127, %v129
      %v322 = vcombine.high %v127, %v129
      %v323 = vcombine.low %v130, %v132
      %v324 = vcombine.high %v130, %v132
      %v325 = vcombine.low %v131, %v133
      %v326 = vcombine.high %v131, %v133
      %v335 = vsel %vm309, %v319, 0.0
      %v336 = vsel %vm309, %v320, 0.0
      %v337 = vsel %vm309, %v321, 0.0
      %v338 = vsel %vm309, %v322, 0.0
      %v339 = vsel %vm310, %v323, 0.0
      %v340 = vsel %vm310, %v324, 0.0
      %v341 = vsel %vm310, %v325, 0.0
      %v342 = vsel %vm310, %v326, 0.0
      %v351 = vcombine.low %v206, %v208
      %v352 = vcombine.high %v206, %v208
      %v353 = vcombine.low %v207, %v209
      %v354 = vcombine.high %v207, %v209
      %v355 = vcombine.low %v210, %v212
      %v356 = vcombine.high %v210, %v212
      %v357 = vcombine.low %v211, %v213
      %v358 = vcombine.high %v211, %v213
      %v367 = vsel %vm309, %v351, 0.0
      %v368 = vsel %vm309, %v352, 0.0
      %v369 = vsel %vm309, %v353, 0.0
      %v370 = vsel %vm309, %v354, 0.0
      %v371 = vsel %vm310, %v355, 0.0
      %v372 = vsel %vm310, %v356, 0.0
      %v373 = vsel %vm310, %v357, 0.0
      %v374 = vsel %vm310, %v358, 0.0
      %v375 = vld [vmem:[#allocation7] sm:$0xff]
      %v376 = vld [vmem:[#allocation7 + $0x8] sm:$0xff]
      %v377 = vld [vmem:[#allocation7 + $0x10] sm:$0xff]
      %v378 = vld [vmem:[#allocation7 + $0x18] sm:$0xff]
      %v379 = vadd.f32 %v335, %v339
      %v380 = vadd.f32 %v336, %v340
      %v381 = vadd.f32 %v337, %v341
      %v382 = vadd.f32 %v338, %v342
      %v383 = vadd.f32 %v375, %v379
      %v384 = vadd.f32 %v376, %v380
      %v385 = vadd.f32 %v377, %v381
      %v386 = vadd.f32 %v378, %v382
      %387 = vst [vmem:[#allocation7] sm:$0xff] %v383
      %388 = vst [vmem:[#allocation7 + $0x8] sm:$0xff] %v384
      %389 = vst [vmem:[#allocation7 + $0x10] sm:$0xff] %v385
      %390 = vst [vmem:[#allocation7 + $0x18] sm:$0xff] %v386
      %v391 = vld [vmem:[#allocation8] sm:$0xff]
      %v392 = vld [vmem:[#allocation8 + $0x8] sm:$0xff]
      %v393 = vld [vmem:[#allocation8 + $0x10] sm:$0xff]
      %v394 = vld [vmem:[#allocation8 + $0x18] sm:$0xff]
      %v395 = vadd.f32 %v367, %v371
      %v396 = vadd.f32 %v368, %v372
      %v397 = vadd.f32 %v369, %v373
      %v398 = vadd.f32 %v370, %v374
      %v399 = vadd.f32 %v391, %v395
      %v400 = vadd.f32 %v392, %v396
      %v401 = vadd.f32 %v393, %v397
      %v402 = vadd.f32 %v394, %v398
      %403 = vst [vmem:[#allocation8] sm:$0xff] %v399
      %404 = vst [vmem:[#allocation8 + $0x8] sm:$0xff] %v400
      %405 = vst [vmem:[#allocation8 + $0x10] sm:$0xff] %v401
      %406 = vst [vmem:[#allocation8 + $0x18] sm:$0xff] %v402
    $region29: #{tpu_custom_call.1} parent=1 // pred_fallthru
      _
    // Predicated region
    $region30: #{tpu_custom_call.1} parent=1 // pred_check
      _
    $region31: #{tpu_custom_call.1} parent=1 // pred_check_branch
      %408 = sbr.rel (0) target = $region33
    $region32: #{tpu_custom_call.1} parent=1 // pred_region
      %s410 = ssub.s32 512, 512
      %411 = vsyncadd [#allocation4], %s410
      %s413 = sshll.u32 [#allocation7], 4
      %s414 = int_to_ptr.vmem [resolvable:$true] %s413
      %416 = dma.vmem_to_hbm [thread:$0]  %s414, 512, %s2, [#allocation4]
    $region33: #{tpu_custom_call.1} parent=1 // pred_fallthru
      _
    // Predicated region
    $region34: #{tpu_custom_call.1} parent=1 // pred_check
      _
    $region35: #{tpu_custom_call.1} parent=1 // pred_check_branch
      %418 = sbr.rel (0) target = $region37
    $region36: #{tpu_custom_call.1} parent=1 // pred_region
      %s420 = ssub.s32 512, 512
      %421 = vsyncadd [#allocation9], %s420
      %s423 = sshll.u32 [#allocation8], 4
      %s424 = int_to_ptr.vmem [resolvable:$true] %s423
      %426 = dma.vmem_to_hbm [thread:$0]  %s424, 512, %s3, [#allocation9]
    $region37: #{tpu_custom_call.1} parent=1 // pred_fallthru
      _
    // Predicated region
    $region38: #{tpu_custom_call.1} parent=1 // pred_check
      _
    $region39: #{tpu_custom_call.1} parent=1 // pred_check_branch
      %428 = sbr.rel (0) target = $region41
    $region40: #{tpu_custom_call.1} parent=1 // pred_region
      %429 = dma.done [#allocation4], 512
    $region41: #{tpu_custom_call.1} parent=1 // pred_fallthru
      _
    // Predicated region
    $region42: #{tpu_custom_call.1} parent=1 // pred_check
      _
    $region43: #{tpu_custom_call.1} parent=1 // pred_check_branch
      %431 = sbr.rel (0) target = $region45
    $region44: #{tpu_custom_call.1} parent=1 // pred_region
      %432 = dma.done [#allocation9], 512
    $region45: #{tpu_custom_call.1} parent=1 // pred_fallthru
      _
    %433 = vsyncpa [#allocation3], 1
    %434 = vsyncpa [#allocation6], 1
    %435 = vsyncpa [#allocation4], 1
    %436 = vsyncpa [#allocation9], 1

</llo_original>
